<compile_context>
chip_gen: v5e
topology: v5e:2x2
jax: 0.10.0
libtpu: 0.0.40
codegen_flags: <defaults>
</compile_context>

<pallas_src>
import functools

import jax
import jax.numpy as jnp
from jax.experimental import pallas as pl
from jax.experimental.pallas import tpu as pltpu

# ----------------------------- model dims ----------------------------------
VOCAB = 128            # vocab size (lane-friendly; == lane width)
D_MODEL = 32           # hidden size
L_ENC = 16             # encoder sequence length
L_DEC = 8              # max_answer_choice_length
PAD_ID = 0             # tokenizer.pad_token_id (T5 convention)
PADDING_TOKEN = -100   # ignore_index sentinel used by F.cross_entropy
LENGTH_NORM = 1.0      # config.length_norm
OUT_LANES = 128        # lane-dense output row width (== choice scatter lanes)
COMPUTE_DTYPE = jnp.bfloat16   # MXU input dtype (accumulation stays f32)


# --------------------------- Pallas kernel ----------------------------------
def _dec_ce_kernel(ids_ref, tgt_ref, embed_ref, ctx_ref, wdec_ref, wlm_ref,
                   out_ref, *, l_dec, out_lanes):
    """Fused decoder embedding gather + projection + lm head + masked CE for
    one block of row-flattened choices (rows = choices_per_block * l_dec,
    padded to a multiple of 16 for bf16 sublane packing).

    ids_ref  : (R, 1)        int32  decoder_input_ids (shift-right)
    tgt_ref  : (R, 1)        int32  lm_target ids (-100 == ignore / row pad)
    embed_ref: (VOCAB, D)    bf16   token embedding table (resident in VMEM)
    ctx_ref  : (128, D)      bf16   per-choice pooled encoder context, padded
    wdec_ref : (D, D)        bf16   decoder projection
    wlm_ref  : (D, V)        bf16   lm head
    out_ref  : (1, 8, 128)   f32    per-choice CE sums in lanes [0, n_choices)
    """
    rows = ids_ref.shape[0]

    # One (R, 128) lane iota reused for: token one-hot gather (VOCAB == 128),
    # target-logit gather (V == 128) and per-choice scatter (OUT_LANES == 128).
    lane = jax.lax.broadcasted_iota(jnp.int32, (rows, out_lanes), 1)
    row_id = jax.lax.broadcasted_iota(jnp.int32, (rows, out_lanes), 0)
    if l_dec & (l_dec - 1) == 0:                       # power of two -> shift
        choice_id = jax.lax.shift_right_logical(row_id, l_dec.bit_length() - 1)
    else:
        choice_id = row_id // l_dec
    choice_mask = (lane == choice_id)                  # (R, 128), reused twice

    # --- in-kernel embedding gather: one-hot @ table on the MXU (exact) -----
    ids = ids_ref[...]                                 # (R, 1)
    id_onehot = (lane == ids).astype(COMPUTE_DTYPE)    # (R, VOCAB)
    emb = jnp.dot(id_onehot, embed_ref[...],
                  preferred_element_type=jnp.float32)  # (R, D) == bf16 rows

    # --- per-token context broadcast via the choice one-hot (no L-replicated
    #     ctx in HBM): choice_onehot @ ctx -> exact copy of bf16 ctx rows -----
    ctx = jnp.dot(choice_mask.astype(COMPUTE_DTYPE), ctx_ref[...],
                  preferred_element_type=jnp.float32)  # (R, D)

    # --- decoder hidden states + lm head (bf16 MXU, f32 accumulate) ---------
    h = jnp.dot(emb.astype(COMPUTE_DTYPE), wdec_ref[...],
                preferred_element_type=jnp.float32)
    h = jnp.tanh(h + ctx)                              # (R, D) f32
    logits = jnp.dot(h.astype(COMPUTE_DTYPE), wlm_ref[...],
                     preferred_element_type=jnp.float32)   # (R, V)

    # --- stable log-softmax denominator over the vocab (lane axis) ----------
    m = jnp.max(logits, axis=-1, keepdims=True)
    lse = m + jnp.log(jnp.sum(jnp.exp(logits - m), axis=-1, keepdims=True))

    # --- gather target logit via lane compare (no dynamic gather on TPU) ----
    # TODO(synk): add a pl.debug_check(tgt < V) for real vocabs; targets >= V
    # silently contribute a 0 target logit here (reference clips instead).
    tgt = tgt_ref[...]                                 # (R, 1)
    tgt_logit = jnp.sum(jnp.where(lane == tgt, logits, 0.0),
                        axis=-1, keepdims=True)        # (R, 1)
    valid = (tgt >= 0).astype(jnp.float32)             # ignores -100 and row pad
    ce = valid * (lse - tgt_logit)                     # (R, 1)

    # --- per-choice sum: scatter rows into lanes, lane-dense (8,128) store --
    row_sums = jnp.sum(ce * choice_mask.astype(jnp.float32),
                       axis=0, keepdims=True)          # (1, 128)
    out_ref[0] = jnp.broadcast_to(row_sums, (8, out_lanes))


def _num_row_blocks(n_choices, l_dec):
    """Grid size. Split across the two v7x TensorCores only when each block
    carries enough MXU work to amortize the ~0.35 us per-grid-step overhead;
    on single-TC v5e/v6e grid steps are a serial loop, so G=1 at small sizes."""
    rows = n_choices * l_dec
    if rows >= 4096 and n_choices % 2 == 0 and ((n_choices // 2) * l_dec) % 16 == 0:
        return 2
    return 1


def decoder_ce_scores(decoder_input_ids, ctx, embed, w_dec, w_lm, lm_target):
    """Per-choice summed cross-entropy.

    decoder_input_ids:(N,L) ctx:(N,D) embed:(VOCAB,D) w_dec:(D,D) w_lm:(D,V)
    lm_target:(N,L) -> (N,)
    """
    N, L = decoder_input_ids.shape
    D = embed.shape[1]
    V = w_lm.shape[1]
    # The shared lane iota relies on VOCAB == V == OUT_LANES (all 128 here).
    # TODO(synk): for a realistic vocab (V >> 128) tile w_lm over V on an inner
    # 'arbitrary' grid axis with an online logsumexp / target-logit accumulator
    # in VMEM scratch, and set vmem_limit_bytes (v7x has only 64 MiB physical
    # VMEM: use ~half the v6e V-tile).
    assert embed.shape[0] == OUT_LANES and V == OUT_LANES

    G = _num_row_blocks(N, L)
    n_per = N // G
    assert n_per * G == N and n_per <= OUT_LANES
    rows_raw = n_per * L
    rows_per = ((rows_raw + 15) // 16) * 16            # bf16 packs 16 rows/vreg

    # Flatten choices x tokens into one row axis; pad rows (ce contribution 0).
    ids = decoder_input_ids.astype(jnp.int32).reshape(G, rows_raw)
    tgt = lm_target.astype(jnp.int32).reshape(G, rows_raw)
    pad_rows = rows_per - rows_raw
    if pad_rows:
        ids = jnp.pad(ids, ((0, 0), (0, pad_rows)))
        tgt = jnp.pad(tgt, ((0, 0), (0, pad_rows)), constant_values=PADDING_TOKEN)
    ids = ids.reshape(G * rows_per, 1)
    tgt = tgt.reshape(G * rows_per, 1)

    # One un-replicated ctx row per choice, padded to the 128-lane scatter width.
    ctx_blocks = ctx.reshape(G, n_per, D)
    ctx_blocks = jnp.pad(ctx_blocks, ((0, 0), (0, OUT_LANES - n_per), (0, 0)))
    ctx_rows = ctx_blocks.reshape(G * OUT_LANES, D).astype(COMPUTE_DTYPE)

    # TODO(synk): if D grows toward 128+ (real HF model) keep as-is; for very
    # small D the lane-masked (·,32) operands could be zero-padded to 128 for
    # unmasked loads — negligible at this size.
    emb_tab = embed.astype(COMPUTE_DTYPE)
    wd = w_dec.astype(COMPUTE_DTYPE)
    wl = w_lm.astype(COMPUTE_DTYPE)

    kernel = functools.partial(_dec_ce_kernel, l_dec=L, out_lanes=OUT_LANES)
    out = pl.pallas_call(
        kernel,
        out_shape=jax.ShapeDtypeStruct((G, 8, OUT_LANES), jnp.float32),
        grid=(G,),
        in_specs=[
            pl.BlockSpec((rows_per, 1), lambda g: (g, 0)),       # decoder ids
            pl.BlockSpec((rows_per, 1), lambda g: (g, 0)),       # lm_target
            pl.BlockSpec((OUT_LANES, D), lambda g: (0, 0)),      # embed table
            pl.BlockSpec((OUT_LANES, D), lambda g: (g, 0)),      # ctx (padded)
            pl.BlockSpec((D, D), lambda g: (0, 0)),              # w_dec
            pl.BlockSpec((D, V), lambda g: (0, 0)),              # w_lm
        ],
        out_specs=pl.BlockSpec((1, 8, OUT_LANES), lambda g: (g, 0, 0)),
        compiler_params=pltpu.CompilerParams(
            dimension_semantics=("parallel",)),
    )(ids, tgt, emb_tab, ctx_rows, wd, wl)
    # block g, sublane 0, lanes [0, n_per) hold that block's per-choice sums.
    return out[:, 0, :n_per].reshape(N)


# ----------------------- EncoderDecoder forward glue -------------------------
def init_params(key):
    k1, k2, k3, k4 = jax.random.split(key, 4)
    return {
        "embed": jax.random.normal(k1, (VOCAB, D_MODEL), jnp.float32) * 0.05,
        "w_enc": jax.random.normal(k2, (D_MODEL, D_MODEL), jnp.float32) * 0.05,
        "w_dec": jax.random.normal(k3, (D_MODEL, D_MODEL), jnp.float32) * 0.05,
        "w_lm":  jax.random.normal(k4, (D_MODEL, VOCAB),  jnp.float32) * 0.05,
    }


def _run_model(params, input_ids, choices_ids):
    """Mirror of EncoderDecoder._run_model (synthetic tiny transformer inside)."""
    bs, num_choices, l_dec = choices_ids.shape
    flat_choices = choices_ids.reshape(bs * num_choices, l_dec)

    # encoder side
    attention_mask = (input_ids != PAD_ID).astype(jnp.float32)                 # (B, L_enc)
    inputs_embeds = params["embed"][input_ids]                                 # (B, L_enc, D)
    # TODO(synk): gradient_checkpointing DummyLayer is identity in forward; omitted.
    enc_h = jax.nn.relu(inputs_embeds @ params["w_enc"]) * attention_mask[..., None]
    # pooled "cross-attention" context
    ctx = enc_h.sum(axis=1) / jnp.maximum(attention_mask.sum(axis=1, keepdims=True), 1.0)

    # one context row per (batch, choice) — NOT replicated over decoder tokens
    ctx_rep = jnp.repeat(ctx[:, None, :], num_choices, axis=1).reshape(
        bs * num_choices, D_MODEL
    )

    # decoder_input_ids: shift right with start token 0
    # TODO(synk): start token hard-coded to 0 (== PAD_ID), matching T5; verify
    # decoder_start_token_id when swapping in a real HF model.
    decoder_input_ids = jnp.concatenate(
        [jnp.zeros_like(flat_choices[:, :1]), flat_choices[:, :-1]], axis=1
    )

    # lm_target: pads -> -100 (equals the PyTorch formula when pad_token_id==0,
    # and stays correct for nonzero pad ids)
    lm_target = jnp.where(flat_choices == PAD_ID, PADDING_TOKEN, flat_choices).astype(jnp.int32)

    # fused Pallas hot path: embed gather + decoder proj + lm head + masked CE
    ce_sum = decoder_ce_scores(decoder_input_ids, ctx_rep, params["embed"],
                               params["w_dec"], params["w_lm"], lm_target)
    choices_scores = ce_sum.reshape(bs, num_choices)

    if LENGTH_NORM > 0:
        lens = (choices_ids != PAD_ID).sum(axis=-1).astype(jnp.float32)
        lens = jnp.maximum(lens, 1.0)      # guard fully-padded choice (no div-by-0)
        choices_scores = choices_scores / jnp.power(lens, LENGTH_NORM)
    choices_scores = -choices_scores
    return choices_scores, lm_target


def forward_eval(params, input_ids, choices_ids):
    """Eval branch of EncoderDecoder.forward: score all choices, softmax, max."""
    # TODO(synk): config.split_choices_at chunking dropped — it is a GPU OOM
    # workaround; per-choice scores are independent, so one pallas_call over
    # all choices is mathematically identical and avoids extra dispatches.
    choices_scores, _ = _run_model(params, input_ids, choices_ids)
    choices_scores = jax.nn.softmax(choices_scores, axis=-1)
    pred_score = choices_scores.max(axis=1)
    prediction = choices_scores.argmax(axis=1)
    return prediction, pred_score, choices_scores


# ------------------------ pure-JAX reference check ---------------------------
def _ce_ref(params, decoder_input_ids, ctx, lm_target):
    """Pure-JAX reference using the same bf16-matmul / f32-accumulate recipe."""
    emb = params["embed"].astype(COMPUTE_DTYPE)[decoder_input_ids]             # (N, L, D)
    c = ctx.astype(COMPUTE_DTYPE).astype(jnp.float32)                          # (N, D)
    h = jnp.dot(emb, params["w_dec"].astype(COMPUTE_DTYPE),
                preferred_element_type=jnp.float32)
    h = jnp.tanh(h + c[:, None, :])
    logits = jnp.dot(h.astype(COMPUTE_DTYPE), params["w_lm"].astype(COMPUTE_DTYPE),
                     preferred_element_type=jnp.float32)                       # (N, L, V)
    lse = jax.scipy.special.logsumexp(logits, axis=-1)                         # (N, L)
    t = lm_target.astype(jnp.int32)
    tl = jnp.take_along_axis(logits, jnp.clip(t, 0, None)[..., None], axis=-1)[..., 0]
    ce = jnp.where(t >= 0, lse - tl, 0.0)
    return ce.sum(axis=-1)                                                     # (N,)


if __name__ == "__main__":
    key = jax.random.PRNGKey(0)
    kp, ki, kc, kl = jax.random.split(key, 4)

    params = init_params(kp)

    B, C = 2, 4
    input_ids = jax.random.randint(ki, (B, L_ENC), 1, VOCAB, dtype=jnp.int32)
    input_ids = input_ids.at[:, -3:].set(PAD_ID)                 # some encoder padding
    choices_ids = jax.random.randint(kc, (B, C, L_DEC), 1, VOCAB, dtype=jnp.int32)
    choices_ids = choices_ids.at[:, :, -2:].set(PAD_ID)          # pad tails of choices
    labels = jax.random.randint(kl, (B,), 0, C, dtype=jnp.int32)

    prediction, pred_score, choices_scores = forward_eval(params, input_ids, choices_ids)
    jax.block_until_ready((prediction, pred_score, choices_scores))

    # sanity: Pallas fused kernel vs pure-JAX reference on the scoring path
    flat = choices_ids.reshape(B * C, L_DEC)
    dec_in = jnp.concatenate([jnp.zeros_like(flat[:, :1]), flat[:, :-1]], axis=1)
    attn = (input_ids != PAD_ID).astype(jnp.float32)
    enc_h = jax.nn.relu(params["embed"][input_ids] @ params["w_enc"]) * attn[..., None]
    ctx = enc_h.sum(axis=1) / jnp.maximum(attn.sum(axis=1, keepdims=True), 1.0)
    ctx_rep = jnp.repeat(ctx[:, None, :], C, axis=1).reshape(B * C, D_MODEL)
    lm_target = jnp.where(flat == PAD_ID, PADDING_TOKEN, flat).astype(jnp.int32)
    got = decoder_ce_scores(dec_in, ctx_rep, params["embed"],
                            params["w_dec"], params["w_lm"], lm_target)
    want = _ce_ref(params, dec_in, ctx_rep, lm_target)
    assert jnp.allclose(got, want, rtol=2e-3, atol=2e-3), (got, want)

    print("KERNEL_OK")
</pallas_src>

<mosaic_0001>
module attributes {stable_mosaic.version = 11 : i64} {
  func.func @_dec_ce_kernel(%arg0: i32, %arg1: memref<64x1xi32, #tpu.memory_space<vmem>>, %arg2: memref<64x1xi32, #tpu.memory_space<vmem>>, %arg3: memref<128x32xbf16, #tpu.memory_space<vmem>>, %arg4: memref<128x32xbf16, #tpu.memory_space<vmem>>, %arg5: memref<32x32xbf16, #tpu.memory_space<vmem>>, %arg6: memref<32x128xbf16, #tpu.memory_space<vmem>>, %arg7: memref<1x8x128xf32, #tpu.memory_space<vmem>>) attributes {dimension_semantics = [#tpu.dimension_semantics<parallel>], iteration_bounds = array<i64: 1>, scalar_prefetch = 0 : i64, scratch_operands = 0 : i64, tpu.core_type = #tpu.core_type<tc>, window_params = [{transform_indices = @transform_0, window_bounds = array<i64: 64, 1>}, {transform_indices = @transform_1, window_bounds = array<i64: 64, 1>}, {pipeline_mode = #tpu.pipeline_mode<synchronous>, transform_indices = @transform_2, window_bounds = array<i64: 128, 32>}, {transform_indices = @transform_3, window_bounds = array<i64: 128, 32>}, {pipeline_mode = #tpu.pipeline_mode<synchronous>, transform_indices = @transform_4, window_bounds = array<i64: 32, 32>}, {pipeline_mode = #tpu.pipeline_mode<synchronous>, transform_indices = @transform_5, window_bounds = array<i64: 32, 128>}, {transform_indices = @transform_6, window_bounds = array<i64: 1, 8, 128>}]} {
    %0 = tpu.iota {dimensions = array<i32: 1>} : vector<64x128xi32>
    %1 = tpu.iota {dimensions = array<i32: 0>} : vector<64x128xi32>
    %c3_i32 = arith.constant 3 : i32
    %2 = vector.broadcast %c3_i32 : i32 to vector<64x128xi32>
    %3 = arith.shrui %1, %2 : vector<64x128xi32>
    %4 = arith.cmpi eq, %0, %3 : vector<64x128xi32>
    %c0 = arith.constant 0 : index
    %c0_0 = arith.constant 0 : index
    %5 = vector.load %arg1[%c0, %c0_0] : memref<64x1xi32, #tpu.memory_space<vmem>>, vector<64x1xi32>
    %6 = vector.broadcast %5 : vector<64x1xi32> to vector<64x128xi32>
    %7 = arith.cmpi eq, %0, %6 : vector<64x128xi32>
    %8 = arith.extui %7 : vector<64x128xi1> to vector<64x128xi32>
    %9 = arith.sitofp %8 : vector<64x128xi32> to vector<64x128xf32>
    %10 = arith.truncf %9 : vector<64x128xf32> to vector<64x128xbf16>
    %c0_1 = arith.constant 0 : index
    %c0_2 = arith.constant 0 : index
    %11 = vector.load %arg3[%c0_1, %c0_2] : memref<128x32xbf16, #tpu.memory_space<vmem>>, vector<128x32xbf16>
    %cst = arith.constant dense<0.000000e+00> : vector<64x32xf32>
    %12 = tpu.matmul %10, %11, %cst {dimension_numbers = #tpu.dot_dimension_numbers<[1], [0], [0], [1], [0, 0, 1, 1], [], []>} : vector<64x128xbf16>, vector<128x32xbf16>, vector<64x32xf32> -> vector<64x32xf32>
    %13 = arith.extui %4 : vector<64x128xi1> to vector<64x128xi32>
    %14 = arith.sitofp %13 : vector<64x128xi32> to vector<64x128xf32>
    %15 = arith.truncf %14 : vector<64x128xf32> to vector<64x128xbf16>
    %c0_3 = arith.constant 0 : index
    %c0_4 = arith.constant 0 : index
    %16 = vector.load %arg4[%c0_3, %c0_4] : memref<128x32xbf16, #tpu.memory_space<vmem>>, vector<128x32xbf16>
    %cst_5 = arith.constant dense<0.000000e+00> : vector<64x32xf32>
    %17 = tpu.matmul %15, %16, %cst_5 {dimension_numbers = #tpu.dot_dimension_numbers<[1], [0], [0], [1], [0, 0, 1, 1], [], []>} : vector<64x128xbf16>, vector<128x32xbf16>, vector<64x32xf32> -> vector<64x32xf32>
    %18 = arith.truncf %12 : vector<64x32xf32> to vector<64x32xbf16>
    %c0_6 = arith.constant 0 : index
    %c0_7 = arith.constant 0 : index
    %19 = vector.load %arg5[%c0_6, %c0_7] : memref<32x32xbf16, #tpu.memory_space<vmem>>, vector<32x32xbf16>
    %cst_8 = arith.constant dense<0.000000e+00> : vector<64x32xf32>
    %20 = tpu.matmul %18, %19, %cst_8 {dimension_numbers = #tpu.dot_dimension_numbers<[1], [0], [0], [1], [0, 0, 1, 1], [], []>} : vector<64x32xbf16>, vector<32x32xbf16>, vector<64x32xf32> -> vector<64x32xf32>
    %21 = arith.addf %20, %17 : vector<64x32xf32>
    %22 = math.tanh %21 : vector<64x32xf32>
    %23 = arith.truncf %22 : vector<64x32xf32> to vector<64x32xbf16>
    %c0_9 = arith.constant 0 : index
    %c0_10 = arith.constant 0 : index
    %24 = vector.load %arg6[%c0_9, %c0_10] : memref<32x128xbf16, #tpu.memory_space<vmem>>, vector<32x128xbf16>
    %cst_11 = arith.constant dense<0.000000e+00> : vector<64x128xf32>
    %25 = tpu.matmul %23, %24, %cst_11 {dimension_numbers = #tpu.dot_dimension_numbers<[1], [0], [0], [1], [0, 0, 1, 1], [], []>} : vector<64x32xbf16>, vector<32x128xbf16>, vector<64x128xf32> -> vector<64x128xf32>
    %cst_12 = arith.constant dense<0xFF800000> : vector<64xf32>
    %26 = vector.multi_reduction <maximumf>, %25, %cst_12 [1] : vector<64x128xf32> to vector<64xf32>
    %27 = vector.shape_cast %26 : vector<64xf32> to vector<64x1xf32>
    %28 = vector.broadcast %27 : vector<64x1xf32> to vector<64x128xf32>
    %29 = arith.subf %25, %28 : vector<64x128xf32>
    %30 = math.exp %29 : vector<64x128xf32>
    %cst_13 = arith.constant dense<0.000000e+00> : vector<64xf32>
    %31 = vector.multi_reduction <add>, %30, %cst_13 [1] : vector<64x128xf32> to vector<64xf32>
    %32 = vector.shape_cast %31 : vector<64xf32> to vector<64x1xf32>
    %33 = math.log %32 : vector<64x1xf32>
    %34 = arith.addf %27, %33 : vector<64x1xf32>
    %c0_14 = arith.constant 0 : index
    %c0_15 = arith.constant 0 : index
    %35 = vector.load %arg2[%c0_14, %c0_15] : memref<64x1xi32, #tpu.memory_space<vmem>>, vector<64x1xi32>
    %36 = vector.broadcast %35 : vector<64x1xi32> to vector<64x128xi32>
    %37 = arith.cmpi eq, %0, %36 : vector<64x128xi32>
    %cst_16 = arith.constant 0.000000e+00 : f32
    %38 = vector.broadcast %cst_16 : f32 to vector<64x128xf32>
    %39 = arith.select %37, %25, %38 : vector<64x128xi1>, vector<64x128xf32>
    %cst_17 = arith.constant dense<0.000000e+00> : vector<64xf32>
    %40 = vector.multi_reduction <add>, %39, %cst_17 [1] : vector<64x128xf32> to vector<64xf32>
    %41 = vector.shape_cast %40 : vector<64xf32> to vector<64x1xf32>
    %c0_i32 = arith.constant 0 : i32
    %42 = vector.broadcast %c0_i32 : i32 to vector<64x1xi32>
    %43 = arith.cmpi sge, %35, %42 : vector<64x1xi32>
    %44 = arith.extui %43 : vector<64x1xi1> to vector<64x1xi32>
    %45 = arith.sitofp %44 : vector<64x1xi32> to vector<64x1xf32>
    %46 = arith.subf %34, %41 : vector<64x1xf32>
    %47 = arith.mulf %45, %46 : vector<64x1xf32>
    %48 = arith.extui %4 : vector<64x128xi1> to vector<64x128xi32>
    %49 = arith.sitofp %48 : vector<64x128xi32> to vector<64x128xf32>
    %50 = vector.broadcast %47 : vector<64x1xf32> to vector<64x128xf32>
    %51 = arith.mulf %50, %49 : vector<64x128xf32>
    %cst_18 = arith.constant dense<0.000000e+00> : vector<128xf32>
    %52 = vector.multi_reduction <add>, %51, %cst_18 [0] : vector<64x128xf32> to vector<128xf32>
    %53 = vector.shape_cast %52 : vector<128xf32> to vector<1x128xf32>
    %54 = vector.shape_cast %53 : vector<1x128xf32> to vector<1x128xf32>
    %55 = vector.broadcast %54 : vector<1x128xf32> to vector<8x128xf32>
    %c0_19 = arith.constant 0 : index
    %c0_20 = arith.constant 0 : index
    %c0_21 = arith.constant 0 : index
    %56 = vector.load %arg7[%c0_19, %c0_20, %c0_21] : memref<1x8x128xf32, #tpu.memory_space<vmem>>, vector<1x8x128xf32>
    %57 = vector.shape_cast %56 : vector<1x8x128xf32> to vector<8x128xf32>
    %58 = vector.shape_cast %55 : vector<8x128xf32> to vector<1x8x128xf32>
    tpu.vector_store %arg7[%c0_19, %c0_20, %c0_21], %58 {strides = array<i32>} : memref<1x8x128xf32, #tpu.memory_space<vmem>>, vector<1x8x128xf32>,
    return
  }
  func.func @transform_0(%arg0: i32) -> (i32, i32) {
    %c0_i32 = arith.constant 0 : i32
    %c0_i32_0 = arith.constant 0 : i32
    return %arg0, %c0_i32 : i32, i32
  }
  func.func @transform_1(%arg0: i32) -> (i32, i32) {
    %c0_i32 = arith.constant 0 : i32
    %c0_i32_0 = arith.constant 0 : i32
    return %arg0, %c0_i32 : i32, i32
  }
  func.func @transform_2(%arg0: i32) -> (i32, i32) {
    %c0_i32 = arith.constant 0 : i32
    %c0_i32_0 = arith.constant 0 : i32
    %c0_i32_1 = arith.constant 0 : i32
    return %c0_i32, %c0_i32_0 : i32, i32
  }
  func.func @transform_3(%arg0: i32) -> (i32, i32) {
    %c0_i32 = arith.constant 0 : i32
    %c0_i32_0 = arith.constant 0 : i32
    return %arg0, %c0_i32 : i32, i32
  }
  func.func @transform_4(%arg0: i32) -> (i32, i32) {
    %c0_i32 = arith.constant 0 : i32
    %c0_i32_0 = arith.constant 0 : i32
    %c0_i32_1 = arith.constant 0 : i32
    return %c0_i32, %c0_i32_0 : i32, i32
  }
  func.func @transform_5(%arg0: i32) -> (i32, i32) {
    %c0_i32 = arith.constant 0 : i32
    %c0_i32_0 = arith.constant 0 : i32
    %c0_i32_1 = arith.constant 0 : i32
    return %c0_i32, %c0_i32_0 : i32, i32
  }
  func.func @transform_6(%arg0: i32) -> (i32, i32, i32) {
    %c0_i32 = arith.constant 0 : i32
    %c0_i32_0 = arith.constant 0 : i32
    %c0_i32_1 = arith.constant 0 : i32
    return %arg0, %c0_i32, %c0_i32_0 : i32, i32, i32
  }
}

</mosaic_0001>

<llo_original>
// kernel: tpu_custom_call.1
$region0: #{tpu_custom_call.1}
  #allocation0 [shape = 'u32[]', space=smem, size = 0x4, offset = 0x4, fixed_abs, tag = 'smem constant byte address 0x4 - core index']
  #allocation1 [shape = 'u32[72,128]{1,0:T(1,128)}', space=vmem, size = 0x9000, scoped, tag = 'internal scratch']
  %s0 = inlined_call_operand.vmem [shape: s32[64,1], index: 0, kind: input, shape index: {}]
  %s1 = inlined_call_operand.vmem [shape: s32[64,1], index: 1, kind: input, shape index: {}]
  %s2 = inlined_call_operand.vmem [shape: bf16[128,32], index: 2, kind: input, shape index: {}]
  %s3 = inlined_call_operand.vmem [shape: bf16[128,32], index: 3, kind: input, shape index: {}]
  %s4 = inlined_call_operand.vmem [shape: bf16[32,32], index: 4, kind: input, shape index: {}]
  %s5 = inlined_call_operand.vmem [shape: bf16[32,128], index: 5, kind: input, shape index: {}]
  %s6 = inlined_call_operand.hbm [shape: f32[1,8,128], index: 6, kind: output, shape index: {}]
  %s7 = sld [smem:[#allocation0]]
  $region34: #{tpu_custom_call.1} parent=0
    _
  %s9 = ssub.s32 1, %s7
  %s10 = scalar_select 0, %s9, %s7
  $region1: #{tpu_custom_call.1} parent=0
    #allocation2 [shape = 'u8[4096]{0}', space=vmem, size = 0x1000, scoped, tag = 'output window, operand 0, single buffered']
    #allocation3 [shape = 's32[1]{0}', space=sflag, size = 0x4, scoped, tag = 'scoped memory for tpu_custom_call.1']
    %11 = vsyncpa [#allocation3], 0
    // Predicated region
    $region2: #{tpu_custom_call.1} parent=1 // pred_check
      _
    $region3: #{tpu_custom_call.1} parent=1 // pred_check_branch
      %13 = sbr.rel (0) target = $region5
    $region4: #{tpu_custom_call.1} parent=1 // pred_region
      _
    $region5: #{tpu_custom_call.1} parent=1 // pred_fallthru
      _
    // Predicated region
    $region6: #{tpu_custom_call.1} parent=1 // pred_check
      _
    $region7: #{tpu_custom_call.1} parent=1 // pred_check_branch
      %15 = sbr.rel (0) target = $region9
    $region8: #{tpu_custom_call.1} parent=1 // pred_region
      _
    $region9: #{tpu_custom_call.1} parent=1 // pred_fallthru
      _
    // Predicated region
    $region10: #{tpu_custom_call.1} parent=1 // pred_check
      _
    $region11: #{tpu_custom_call.1} parent=1 // pred_check_branch
      %17 = sbr.rel (0) target = $region13
    $region12: #{tpu_custom_call.1} parent=1 // pred_region
      _
    $region13: #{tpu_custom_call.1} parent=1 // pred_fallthru
      _
    // Predicated region
    $region14: #{tpu_custom_call.1} parent=1 // pred_check
      _
    $region15: #{tpu_custom_call.1} parent=1 // pred_check_branch
      %19 = sbr.rel (0) target = $region17
    $region16: #{tpu_custom_call.1} parent=1 // pred_region
      _
    $region17: #{tpu_custom_call.1} parent=1 // pred_fallthru
      _
    // Predicated region
    $region18: #{tpu_custom_call.1} parent=1 // pred_check
      _
    $region19: #{tpu_custom_call.1} parent=1 // pred_check_branch
      %21 = sbr.rel (0) target = $region21
    $region20: #{tpu_custom_call.1} parent=1 // pred_region
      _
    $region21: #{tpu_custom_call.1} parent=1 // pred_fallthru
      _
    // Predicated region
    $region22: #{tpu_custom_call.1} parent=1 // pred_check
      _
    $region23: #{tpu_custom_call.1} parent=1 // pred_check_branch
      %23 = sbr.rel (0) target = $region25
    $region24: #{tpu_custom_call.1} parent=1 // pred_region
      _
    $region25: #{tpu_custom_call.1} parent=1 // pred_fallthru
      _
    %v25 = vlaneseq
    %v26 = vand.u32 %v25, 127
    %v27 = vlaneseq
    %v28 = vshrl.u32 %v27, 7
    %v29 = vadd.s32 %v28, 8
    %v30 = vadd.s32 %v28, 16
    %v31 = vadd.s32 %v28, 24
    %v32 = vadd.s32 %v28, 32
    %v33 = vadd.s32 %v28, 40
    %v34 = vadd.s32 %v28, 48
    %v35 = vadd.s32 %v28, 56
    %v36 = vshrl.u32 %v28, 3
    %v37 = vshrl.u32 %v29, 3
    %v38 = vshrl.u32 %v30, 3
    %v39 = vshrl.u32 %v31, 3
    %v40 = vshrl.u32 %v32, 3
    %v41 = vshrl.u32 %v33, 3
    %v42 = vshrl.u32 %v34, 3
    %v43 = vshrl.u32 %v35, 3
    %vm44 = vcmp.eq.s32.totalorder %v26, %v36
    %vm45 = vcmp.eq.s32.totalorder %v26, %v37
    %vm46 = vcmp.eq.s32.totalorder %v26, %v38
    %vm47 = vcmp.eq.s32.totalorder %v26, %v39
    %vm48 = vcmp.eq.s32.totalorder %v26, %v40
    %vm49 = vcmp.eq.s32.totalorder %v26, %v41
    %vm50 = vcmp.eq.s32.totalorder %v26, %v42
    %vm51 = vcmp.eq.s32.totalorder %v26, %v43
    %v52 = vld [vmem:[%s0] sm:$0xff]
    %v53 = vld [vmem:[%s0 + $0x8] sm:$0xff]
    %v54 = vld [vmem:[%s0 + $0x10] sm:$0xff]
    %v55 = vld [vmem:[%s0 + $0x18] sm:$0xff]
    %v56 = vld [vmem:[%s0 + $0x20] sm:$0xff]
    %v57 = vld [vmem:[%s0 + $0x28] sm:$0xff]
    %v58 = vld [vmem:[%s0 + $0x30] sm:$0xff]
    %v59 = vld [vmem:[%s0 + $0x38] sm:$0xff]
    %60 = vset.pattern.permute.xlu0 0
    %61 = vperm.xlu0 %60, %v52
    %v62 = vpop.permute.xlu0 %61
    %63 = vset.pattern.permute.xlu0 0
    %64 = vperm.xlu0 %63, %v53
    %v65 = vpop.permute.xlu0 %64
    %66 = vset.pattern.permute.xlu0 0
    %67 = vperm.xlu0 %66, %v54
    %v68 = vpop.permute.xlu0 %67
    %69 = vset.pattern.permute.xlu0 0
    %70 = vperm.xlu0 %69, %v55
    %v71 = vpop.permute.xlu0 %70
    %72 = vset.pattern.permute.xlu0 0
    %73 = vperm.xlu0 %72, %v56
    %v74 = vpop.permute.xlu0 %73
    %75 = vset.pattern.permute.xlu0 0
    %76 = vperm.xlu0 %75, %v57
    %v77 = vpop.permute.xlu0 %76
    %78 = vset.pattern.permute.xlu0 0
    %79 = vperm.xlu0 %78, %v58
    %v80 = vpop.permute.xlu0 %79
    %81 = vset.pattern.permute.xlu0 0
    %82 = vperm.xlu0 %81, %v59
    %v83 = vpop.permute.xlu0 %82
    %vm84 = vcmp.eq.s32.totalorder %v26, %v62
    %vm85 = vcmp.eq.s32.totalorder %v26, %v65
    %vm86 = vcmp.eq.s32.totalorder %v26, %v68
    %vm87 = vcmp.eq.s32.totalorder %v26, %v71
    %vm88 = vcmp.eq.s32.totalorder %v26, %v74
    %vm89 = vcmp.eq.s32.totalorder %v26, %v77
    %vm90 = vcmp.eq.s32.totalorder %v26, %v80
    %vm91 = vcmp.eq.s32.totalorder %v26, %v83
    %v92 = vsel %vm84, 1, 0
    %v93 = vsel %vm85, 1, 0
    %v94 = vsel %vm86, 1, 0
    %v95 = vsel %vm87, 1, 0
    %v96 = vsel %vm88, 1, 0
    %v97 = vsel %vm89, 1, 0
    %v98 = vsel %vm90, 1, 0
    %v99 = vsel %vm91, 1, 0
    %v100 = vcvt.s32.f32 %v92
    %v101 = vcvt.s32.f32 %v93
    %v102 = vcvt.s32.f32 %v94
    %v103 = vcvt.s32.f32 %v95
    %v104 = vcvt.s32.f32 %v96
    %v105 = vcvt.s32.f32 %v97
    %v106 = vcvt.s32.f32 %v98
    %v107 = vcvt.s32.f32 %v99
    %v108 = vpack.c.bf16 %v101, %v100
    %v109 = vpack.c.bf16 %v103, %v102
    %v110 = vpack.c.bf16 %v105, %v104
    %v111 = vpack.c.bf16 %v107, %v106
    %v112 = vld [vmem:[%s2] sm:$0xf]
    %v113 = vld [vmem:[%s2 + $0x4] sm:$0xf]
    %v114 = vld [vmem:[%s2 + $0x8] sm:$0xf]
    %v115 = vld [vmem:[%s2 + $0xc] sm:$0xf]
    %v116 = vld [vmem:[%s2 + $0x10] sm:$0xf]
    %v117 = vld [vmem:[%s2 + $0x14] sm:$0xf]
    %v118 = vld [vmem:[%s2 + $0x18] sm:$0xf]
    %v119 = vld [vmem:[%s2 + $0x1c] sm:$0xf]
    %v120 = vld [vmem:[%s2 + $0x20] sm:$0xf]
    %v121 = vld [vmem:[%s2 + $0x24] sm:$0xf]
    %v122 = vld [vmem:[%s2 + $0x28] sm:$0xf]
    %v123 = vld [vmem:[%s2 + $0x2c] sm:$0xf]
    %v124 = vld [vmem:[%s2 + $0x30] sm:$0xf]
    %v125 = vld [vmem:[%s2 + $0x34] sm:$0xf]
    %v126 = vld [vmem:[%s2 + $0x38] sm:$0xf]
    %v127 = vld [vmem:[%s2 + $0x3c] sm:$0xf]
    %v144 = vunpack.c.l.b16 %v112
    %v145 = vunpack.c.l.b16 %v113
    %v146 = vunpack.c.l.b16 %v114
    %v147 = vunpack.c.l.b16 %v115
    %v148 = vunpack.c.l.b16 %v116
    %v149 = vunpack.c.l.b16 %v117
    %v150 = vunpack.c.l.b16 %v118
    %v151 = vunpack.c.l.b16 %v119
    %v152 = vunpack.c.l.b16 %v120
    %v153 = vunpack.c.l.b16 %v121
    %v154 = vunpack.c.l.b16 %v122
    %v155 = vunpack.c.l.b16 %v123
    %v156 = vunpack.c.l.b16 %v124
    %v157 = vunpack.c.l.b16 %v125
    %v158 = vunpack.c.l.b16 %v126
    %v159 = vunpack.c.l.b16 %v127
    %v160 = vpack.c.b16 %v145, %v144
    %v161 = vpack.c.b16 %v147, %v146
    %v162 = vpack.c.b16 %v149, %v148
    %v163 = vpack.c.b16 %v151, %v150
    %v164 = vpack.c.b16 %v153, %v152
    %v165 = vpack.c.b16 %v155, %v154
    %v166 = vpack.c.b16 %v157, %v156
    %v167 = vpack.c.b16 %v159, %v158
    %176 = vmatpush.bf16.msra.mxu0 %v167
    %177 = vmatpush.bf16.msra.mxu0 %v166
    %178 = vmatpush.bf16.msra.mxu0 %v165
    %179 = vmatpush.bf16.msra.mxu0 %v164
    %180 = vmatpush.bf16.msra.mxu0 %v163
    %181 = vmatpush.bf16.msra.mxu0 %v162
    %182 = vmatpush.bf16.msra.mxu0 %v161
    %183 = vmatpush.bf16.msra.mxu0 %v160
    %184 = vmatmul.bf16.gmra.mxu0 %v108
    %v185 = vpop.f32.mrf.mxu0
    %v186 = vadd.f32 0.0, %v185
    %v187 = vpop.f32.mrf.mxu0
    %v188 = vadd.f32 0.0, %v187
    %189 = vmatmul.bf16.gmra.mxu0 %v109
    %v190 = vpop.f32.mrf.mxu0
    %v191 = vadd.f32 0.0, %v190
    %v192 = vpop.f32.mrf.mxu0
    %v193 = vadd.f32 0.0, %v192
    %194 = vmatmul.bf16.gmra.mxu0 %v110
    %v195 = vpop.f32.mrf.mxu0
    %v196 = vadd.f32 0.0, %v195
    %v197 = vpop.f32.mrf.mxu0
    %v198 = vadd.f32 0.0, %v197
    %199 = vmatmul.bf16.gmra.mxu0 %v111
    %v200 = vpop.f32.mrf.mxu0
    %v201 = vadd.f32 0.0, %v200
    %v202 = vpop.f32.mrf.mxu0
    %v203 = vadd.f32 0.0, %v202
    %204 = vdwg.mxu0
    %v205 = vsel %vm44, 1, 0
    %v206 = vsel %vm45, 1, 0
    %v207 = vsel %vm46, 1, 0
    %v208 = vsel %vm47, 1, 0
    %v209 = vsel %vm48, 1, 0
    %v210 = vsel %vm49, 1, 0
    %v211 = vsel %vm50, 1, 0
    %v212 = vsel %vm51, 1, 0
    %v213 = vcvt.s32.f32 %v205
    %v214 = vcvt.s32.f32 %v206
    %v215 = vcvt.s32.f32 %v207
    %v216 = vcvt.s32.f32 %v208
    %v217 = vcvt.s32.f32 %v209
    %v218 = vcvt.s32.f32 %v210
    %v219 = vcvt.s32.f32 %v211
    %v220 = vcvt.s32.f32 %v212
    %v221 = vpack.c.bf16 %v214, %v213
    %v222 = vpack.c.bf16 %v216, %v215
    %v223 = vpack.c.bf16 %v218, %v217
    %v224 = vpack.c.bf16 %v220, %v219
    %v225 = vld [vmem:[%s3] sm:$0xf]
    %v226 = vld [vmem:[%s3 + $0x4] sm:$0xf]
    %v227 = vld [vmem:[%s3 + $0x8] sm:$0xf]
    %v228 = vld [vmem:[%s3 + $0xc] sm:$0xf]
    %v229 = vld [vmem:[%s3 + $0x10] sm:$0xf]
    %v230 = vld [vmem:[%s3 + $0x14] sm:$0xf]
    %v231 = vld [vmem:[%s3 + $0x18] sm:$0xf]
    %v232 = vld [vmem:[%s3 + $0x1c] sm:$0xf]
    %v233 = vld [vmem:[%s3 + $0x20] sm:$0xf]
    %v234 = vld [vmem:[%s3 + $0x24] sm:$0xf]
    %v235 = vld [vmem:[%s3 + $0x28] sm:$0xf]
    %v236 = vld [vmem:[%s3 + $0x2c] sm:$0xf]
    %v237 = vld [vmem:[%s3 + $0x30] sm:$0xf]
    %v238 = vld [vmem:[%s3 + $0x34] sm:$0xf]
    %v239 = vld [vmem:[%s3 + $0x38] sm:$0xf]
    %v240 = vld [vmem:[%s3 + $0x3c] sm:$0xf]
    %v257 = vunpack.c.l.b16 %v225
    %v258 = vunpack.c.l.b16 %v226
    %v259 = vunpack.c.l.b16 %v227
    %v260 = vunpack.c.l.b16 %v228
    %v261 = vunpack.c.l.b16 %v229
    %v262 = vunpack.c.l.b16 %v230
    %v263 = vunpack.c.l.b16 %v231
    %v264 = vunpack.c.l.b16 %v232
    %v265 = vunpack.c.l.b16 %v233
    %v266 = vunpack.c.l.b16 %v234
    %v267 = vunpack.c.l.b16 %v235
    %v268 = vunpack.c.l.b16 %v236
    %v269 = vunpack.c.l.b16 %v237
    %v270 = vunpack.c.l.b16 %v238
    %v271 = vunpack.c.l.b16 %v239
    %v272 = vunpack.c.l.b16 %v240
    %v273 = vpack.c.b16 %v258, %v257
    %v274 = vpack.c.b16 %v260, %v259
    %v275 = vpack.c.b16 %v262, %v261
    %v276 = vpack.c.b16 %v264, %v263
    %v277 = vpack.c.b16 %v266, %v265
    %v278 = vpack.c.b16 %v268, %v267
    %v279 = vpack.c.b16 %v270, %v269
    %v280 = vpack.c.b16 %v272, %v271
    %289 = vmatpush.bf16.msra.mxu0 %v280
    %290 = vmatpush.bf16.msra.mxu0 %v279
    %291 = vmatpush.bf16.msra.mxu0 %v278
    %292 = vmatpush.bf16.msra.mxu0 %v277
    %293 = vmatpush.bf16.msra.mxu0 %v276
    %294 = vmatpush.bf16.msra.mxu0 %v275
    %295 = vmatpush.bf16.msra.mxu0 %v274
    %296 = vmatpush.bf16.msra.mxu0 %v273
    %297 = vmatmul.bf16.gmra.mxu0 %v221
    %v298 = vpop.f32.mrf.mxu0
    %v299 = vadd.f32 0.0, %v298
    %v300 = vpop.f32.mrf.mxu0
    %v301 = vadd.f32 0.0, %v300
    %302 = vmatmul.bf16.gmra.mxu0 %v222
    %v303 = vpop.f32.mrf.mxu0
    %v304 = vadd.f32 0.0, %v303
    %v305 = vpop.f32.mrf.mxu0
    %v306 = vadd.f32 0.0, %v305
    %307 = vmatmul.bf16.gmra.mxu0 %v223
    %v308 = vpop.f32.mrf.mxu0
    %v309 = vadd.f32 0.0, %v308
    %v310 = vpop.f32.mrf.mxu0
    %v311 = vadd.f32 0.0, %v310
    %312 = vmatmul.bf16.gmra.mxu0 %v224
    %v313 = vpop.f32.mrf.mxu0
    %v314 = vadd.f32 0.0, %v313
    %v315 = vpop.f32.mrf.mxu0
    %v316 = vadd.f32 0.0, %v315
    %317 = vdwg.mxu0
    %v318 = vpack.c.bf16 %v188, %v186
    %v319 = vpack.c.bf16 %v193, %v191
    %v320 = vpack.c.bf16 %v198, %v196
    %v321 = vpack.c.bf16 %v203, %v201
    %v322 = vld [vmem:[%s4] sm:$0xf]
    %v323 = vld [vmem:[%s4 + $0x4] sm:$0xf]
    %v324 = vld [vmem:[%s4 + $0x8] sm:$0xf]
    %v325 = vld [vmem:[%s4 + $0xc] sm:$0xf]
    %v330 = vunpack.c.l.b16 %v322
    %v331 = vunpack.c.l.b16 %v323
    %v332 = vunpack.c.l.b16 %v324
    %v333 = vunpack.c.l.b16 %v325
    %v334 = vpack.c.b16 %v331, %v330
    %v335 = vpack.c.b16 %v333, %v332
    %vm338 = vcmask 261120
    %v340 = vsel %vm338, %v318, 0
    %v343 = vsel %vm338, %v319, 0
    %v346 = vsel %vm338, %v320, 0
    %v349 = vsel %vm338, %v321, 0
    %351 = vmatpush.bf16.msra.mxu0 0
    %352 = vmatpush.bf16.msra.mxu0 0
    %353 = vmatpush.bf16.msra.mxu0 0
    %354 = vmatpush.bf16.msra.mxu0 0
    %355 = vmatpush.bf16.msra.mxu0 0
    %356 = vmatpush.bf16.msra.mxu0 0
    %357 = vmatpush.bf16.msra.mxu0 %v335
    %358 = vmatpush.bf16.msra.mxu0 %v334
    %359 = vmatmul.bf16.gmra.mxu0 %v340
    %v360 = vpop.f32.mrf.mxu0
    %v361 = vadd.f32 %v299, %v360
    %v362 = vpop.f32.mrf.mxu0
    %v363 = vadd.f32 %v301, %v362
    %364 = vmatmul.bf16.gmra.mxu0 %v343
    %v365 = vpop.f32.mrf.mxu0
    %v366 = vadd.f32 %v304, %v365
    %v367 = vpop.f32.mrf.mxu0
    %v368 = vadd.f32 %v306, %v367
    %369 = vmatmul.bf16.gmra.mxu0 %v346
    %v370 = vpop.f32.mrf.mxu0
    %v371 = vadd.f32 %v309, %v370
    %v372 = vpop.f32.mrf.mxu0
    %v373 = vadd.f32 %v311, %v372
    %374 = vmatmul.bf16.gmra.mxu0 %v349
    %v375 = vpop.f32.mrf.mxu0
    %v376 = vadd.f32 %v314, %v375
    %v377 = vpop.f32.mrf.mxu0
    %v378 = vadd.f32 %v316, %v377
    %379 = vdwg.mxu0
    %v380 = vtanh.pop %v361
    %v381 = vtanh.pop %v363
    %v382 = vtanh.pop %v366
    %v383 = vtanh.pop %v368
    %v384 = vtanh.pop %v371
    %v385 = vtanh.pop %v373
    %v386 = vtanh.pop %v376
    %v387 = vtanh.pop %v378
    %v388 = vpack.c.bf16 %v381, %v380
    %v389 = vpack.c.bf16 %v383, %v382
    %v390 = vpack.c.bf16 %v385, %v384
    %v391 = vpack.c.bf16 %v387, %v386
    %v392 = vld [vmem:[%s5] sm:$0xf]
    %v393 = vld [vmem:[%s5 + $0x4] sm:$0xf]
    %v394 = vld [vmem:[%s5 + $0x8] sm:$0xf]
    %v395 = vld [vmem:[%s5 + $0xc] sm:$0xf]
    %v400 = vunpack.c.l.b16 %v392
    %v401 = vunpack.c.l.b16 %v393
    %v402 = vunpack.c.l.b16 %v394
    %v403 = vunpack.c.l.b16 %v395
    %v404 = vpack.c.b16 %v401, %v400
    %v405 = vpack.c.b16 %v403, %v402
    %v409 = vsel %vm338, %v388, 0
    %v412 = vsel %vm338, %v389, 0
    %v415 = vsel %vm338, %v390, 0
    %v418 = vsel %vm338, %v391, 0
    %420 = vmatpush.bf16.msra.mxu0 0
    %421 = vmatpush.bf16.msra.mxu0 0
    %422 = vmatpush.bf16.msra.mxu0 0
    %423 = vmatpush.bf16.msra.mxu0 0
    %424 = vmatpush.bf16.msra.mxu0 0
    %425 = vmatpush.bf16.msra.mxu0 0
    %426 = vmatpush.bf16.msra.mxu0 %v405
    %427 = vmatpush.bf16.msra.mxu0 %v404
    %428 = vmatmul.bf16.gmra.mxu0 %v409
    %v429 = vpop.f32.mrf.mxu0
    %v430 = vadd.f32 0.0, %v429
    %v431 = vpop.f32.mrf.mxu0
    %v432 = vadd.f32 0.0, %v431
    %433 = vmatmul.bf16.gmra.mxu0 %v412
    %v434 = vpop.f32.mrf.mxu0
    %v435 = vadd.f32 0.0, %v434
    %v436 = vpop.f32.mrf.mxu0
    %v437 = vadd.f32 0.0, %v436
    %438 = vmatmul.bf16.gmra.mxu0 %v415
    %v439 = vpop.f32.mrf.mxu0
    %v440 = vadd.f32 0.0, %v439
    %v441 = vpop.f32.mrf.mxu0
    %v442 = vadd.f32 0.0, %v441
    %443 = vmatmul.bf16.gmra.mxu0 %v418
    %v444 = vpop.f32.mrf.mxu0
    %v445 = vadd.f32 0.0, %v444
    %v446 = vpop.f32.mrf.mxu0
    %v447 = vadd.f32 0.0, %v446
    %448 = vdwg.mxu0
    %449 = vmax.xlane.f32.xlu0 %v430
    %v450 = vpop.xlane.xlu0 %449
    %451 = vmax.xlane.f32.xlu0 %v432
    %v452 = vpop.xlane.xlu0 %451
    %453 = vmax.xlane.f32.xlu0 %v435
    %v454 = vpop.xlane.xlu0 %453
    %455 = vmax.xlane.f32.xlu0 %v437
    %v456 = vpop.xlane.xlu0 %455
    %457 = vmax.xlane.f32.xlu0 %v440
    %v458 = vpop.xlane.xlu0 %457
    %459 = vmax.xlane.f32.xlu0 %v442
    %v460 = vpop.xlane.xlu0 %459
    %461 = vmax.xlane.f32.xlu0 %v445
    %v462 = vpop.xlane.xlu0 %461
    %463 = vmax.xlane.f32.xlu0 %v447
    %v464 = vpop.xlane.xlu0 %463
    %v465 = vsub.f32 %v430, %v450
    %v466 = vsub.f32 %v432, %v452
    %v467 = vsub.f32 %v435, %v454
    %v468 = vsub.f32 %v437, %v456
    %v469 = vsub.f32 %v440, %v458
    %v470 = vsub.f32 %v442, %v460
    %v471 = vsub.f32 %v445, %v462
    %v472 = vsub.f32 %v447, %v464
    %v473 = vmul.f32 %v465, 1.442695
    %v474 = vpow.pop %v473
    %v475 = vmul.f32 %v466, 1.442695
    %v476 = vpow.pop %v475
    %v477 = vmul.f32 %v467, 1.442695
    %v478 = vpow.pop %v477
    %v479 = vmul.f32 %v468, 1.442695
    %v480 = vpow.pop %v479
    %v481 = vmul.f32 %v469, 1.442695
    %v482 = vpow.pop %v481
    %v483 = vmul.f32 %v470, 1.442695
    %v484 = vpow.pop %v483
    %v485 = vmul.f32 %v471, 1.442695
    %v486 = vpow.pop %v485
    %v487 = vmul.f32 %v472, 1.442695
    %v488 = vpow.pop %v487
    %489 = vadd.xlane.f32.xlu0 %v474
    %v490 = vpop.xlane.xlu0 %489
    %491 = vadd.xlane.f32.xlu0 %v476
    %v492 = vpop.xlane.xlu0 %491
    %493 = vadd.xlane.f32.xlu0 %v478
    %v494 = vpop.xlane.xlu0 %493
    %495 = vadd.xlane.f32.xlu0 %v480
    %v496 = vpop.xlane.xlu0 %495
    %497 = vadd.xlane.f32.xlu0 %v482
    %v498 = vpop.xlane.xlu0 %497
    %499 = vadd.xlane.f32.xlu0 %v484
    %v500 = vpop.xlane.xlu0 %499
    %501 = vadd.xlane.f32.xlu0 %v486
    %v502 = vpop.xlane.xlu0 %501
    %503 = vadd.xlane.f32.xlu0 %v488
    %v504 = vpop.xlane.xlu0 %503
    %v505 = vlog2.pop %v490
    %v506 = vmul.f32 %v505, 0.6931472
    %v507 = vlog2.pop %v492
    %v508 = vmul.f32 %v507, 0.6931472
    %v509 = vlog2.pop %v494
    %v510 = vmul.f32 %v509, 0.6931472
    %v511 = vlog2.pop %v496
    %v512 = vmul.f32 %v511, 0.6931472
    %v513 = vlog2.pop %v498
    %v514 = vmul.f32 %v513, 0.6931472
    %v515 = vlog2.pop %v500
    %v516 = vmul.f32 %v515, 0.6931472
    %v517 = vlog2.pop %v502
    %v518 = vmul.f32 %v517, 0.6931472
    %v519 = vlog2.pop %v504
    %v520 = vmul.f32 %v519, 0.6931472
    %v521 = vadd.f32 %v450, %v506
    %v522 = vadd.f32 %v452, %v508
    %v523 = vadd.f32 %v454, %v510
    %v524 = vadd.f32 %v456, %v512
    %v525 = vadd.f32 %v458, %v514
    %v526 = vadd.f32 %v460, %v516
    %v527 = vadd.f32 %v462, %v518
    %v528 = vadd.f32 %v464, %v520
    %v529 = vld [vmem:[%s1] sm:$0xff]
    %v530 = vld [vmem:[%s1 + $0x8] sm:$0xff]
    %v531 = vld [vmem:[%s1 + $0x10] sm:$0xff]
    %v532 = vld [vmem:[%s1 + $0x18] sm:$0xff]
    %v533 = vld [vmem:[%s1 + $0x20] sm:$0xff]
    %v534 = vld [vmem:[%s1 + $0x28] sm:$0xff]
    %v535 = vld [vmem:[%s1 + $0x30] sm:$0xff]
    %v536 = vld [vmem:[%s1 + $0x38] sm:$0xff]
    %537 = vset.pattern.permute.xlu0 0
    %538 = vperm.xlu0 %537, %v529
    %v539 = vpop.permute.xlu0 %538
    %540 = vset.pattern.permute.xlu0 0
    %541 = vperm.xlu0 %540, %v530
    %v542 = vpop.permute.xlu0 %541
    %543 = vset.pattern.permute.xlu0 0
    %544 = vperm.xlu0 %543, %v531
    %v545 = vpop.permute.xlu0 %544
    %546 = vset.pattern.permute.xlu0 0
    %547 = vperm.xlu0 %546, %v532
    %v548 = vpop.permute.xlu0 %547
    %549 = vset.pattern.permute.xlu0 0
    %550 = vperm.xlu0 %549, %v533
    %v551 = vpop.permute.xlu0 %550
    %552 = vset.pattern.permute.xlu0 0
    %553 = vperm.xlu0 %552, %v534
    %v554 = vpop.permute.xlu0 %553
    %555 = vset.pattern.permute.xlu0 0
    %556 = vperm.xlu0 %555, %v535
    %v557 = vpop.permute.xlu0 %556
    %558 = vset.pattern.permute.xlu0 0
    %559 = vperm.xlu0 %558, %v536
    %v560 = vpop.permute.xlu0 %559
    %vm561 = vcmp.eq.s32.totalorder %v26, %v539
    %vm562 = vcmp.eq.s32.totalorder %v26, %v542
    %vm563 = vcmp.eq.s32.totalorder %v26, %v545
    %vm564 = vcmp.eq.s32.totalorder %v26, %v548
    %vm565 = vcmp.eq.s32.totalorder %v26, %v551
    %vm566 = vcmp.eq.s32.totalorder %v26, %v554
    %vm567 = vcmp.eq.s32.totalorder %v26, %v557
    %vm568 = vcmp.eq.s32.totalorder %v26, %v560
    %v569 = vsel %vm561, %v430, 0.0
    %v570 = vsel %vm562, %v432, 0.0
    %v571 = vsel %vm563, %v435, 0.0
    %v572 = vsel %vm564, %v437, 0.0
    %v573 = vsel %vm565, %v440, 0.0
    %v574 = vsel %vm566, %v442, 0.0
    %v575 = vsel %vm567, %v445, 0.0
    %v576 = vsel %vm568, %v447, 0.0
    %577 = vadd.xlane.f32.xlu0 %v569
    %v578 = vpop.xlane.xlu0 %577
    %579 = vadd.xlane.f32.xlu0 %v570
    %v580 = vpop.xlane.xlu0 %579
    %581 = vadd.xlane.f32.xlu0 %v571
    %v582 = vpop.xlane.xlu0 %581
    %583 = vadd.xlane.f32.xlu0 %v572
    %v584 = vpop.xlane.xlu0 %583
    %585 = vadd.xlane.f32.xlu0 %v573
    %v586 = vpop.xlane.xlu0 %585
    %587 = vadd.xlane.f32.xlu0 %v574
    %v588 = vpop.xlane.xlu0 %587
    %589 = vadd.xlane.f32.xlu0 %v575
    %v590 = vpop.xlane.xlu0 %589
    %591 = vadd.xlane.f32.xlu0 %v576
    %v592 = vpop.xlane.xlu0 %591
    %vm593 = vcmp.ge.s32.totalorder %v529, 0
    %vm594 = vcmp.ge.s32.totalorder %v530, 0
    %vm595 = vcmp.ge.s32.totalorder %v531, 0
    %vm596 = vcmp.ge.s32.totalorder %v532, 0
    %vm597 = vcmp.ge.s32.totalorder %v533, 0
    %vm598 = vcmp.ge.s32.totalorder %v534, 0
    %vm599 = vcmp.ge.s32.totalorder %v535, 0
    %vm600 = vcmp.ge.s32.totalorder %v536, 0
    %v601 = vsel %vm593, 1, 0
    %v602 = vsel %vm594, 1, 0
    %v603 = vsel %vm595, 1, 0
    %v604 = vsel %vm596, 1, 0
    %v605 = vsel %vm597, 1, 0
    %v606 = vsel %vm598, 1, 0
    %v607 = vsel %vm599, 1, 0
    %v608 = vsel %vm600, 1, 0
    %v609 = vcvt.s32.f32 %v601
    %v610 = vcvt.s32.f32 %v602
    %v611 = vcvt.s32.f32 %v603
    %v612 = vcvt.s32.f32 %v604
    %v613 = vcvt.s32.f32 %v605
    %v614 = vcvt.s32.f32 %v606
    %v615 = vcvt.s32.f32 %v607
    %v616 = vcvt.s32.f32 %v608
    %v617 = vsub.f32 %v521, %v578
    %v618 = vsub.f32 %v522, %v580
    %v619 = vsub.f32 %v523, %v582
    %v620 = vsub.f32 %v524, %v584
    %v621 = vsub.f32 %v525, %v586
    %v622 = vsub.f32 %v526, %v588
    %v623 = vsub.f32 %v527, %v590
    %v624 = vsub.f32 %v528, %v592
    %v625 = vmul.f32 %v609, %v617
    %v626 = vmul.f32 %v610, %v618
    %v627 = vmul.f32 %v611, %v619
    %v628 = vmul.f32 %v612, %v620
    %v629 = vmul.f32 %v613, %v621
    %v630 = vmul.f32 %v614, %v622
    %v631 = vmul.f32 %v615, %v623
    %v632 = vmul.f32 %v616, %v624
    %634 = vset.pattern.permute.xlu0 0
    %635 = vperm.xlu0 %634, %v625
    %v636 = vpop.permute.xlu0 %635
    %639 = vset.pattern.permute.xlu0 0
    %640 = vperm.xlu0 %639, %v626
    %v641 = vpop.permute.xlu0 %640
    %644 = vset.pattern.permute.xlu0 0
    %645 = vperm.xlu0 %644, %v627
    %v646 = vpop.permute.xlu0 %645
    %649 = vset.pattern.permute.xlu0 0
    %650 = vperm.xlu0 %649, %v628
    %v651 = vpop.permute.xlu0 %650
    %654 = vset.pattern.permute.xlu0 0
    %655 = vperm.xlu0 %654, %v629
    %v656 = vpop.permute.xlu0 %655
    %659 = vset.pattern.permute.xlu0 0
    %660 = vperm.xlu0 %659, %v630
    %v661 = vpop.permute.xlu0 %660
    %664 = vset.pattern.permute.xlu0 0
    %665 = vperm.xlu0 %664, %v631
    %v666 = vpop.permute.xlu0 %665
    %669 = vset.pattern.permute.xlu0 0
    %670 = vperm.xlu0 %669, %v632
    %v671 = vpop.permute.xlu0 %670
    %v673 = vmul.f32 %v636, %v213
    %v674 = vmul.f32 %v641, %v214
    %v675 = vmul.f32 %v646, %v215
    %v676 = vmul.f32 %v651, %v216
    %v677 = vmul.f32 %v656, %v217
    %v678 = vmul.f32 %v661, %v218
    %v679 = vmul.f32 %v666, %v219
    %v680 = vmul.f32 %v671, %v220
    %v681 = vadd.f32 %v673, %v674
    %v682 = vadd.f32 %v681, %v675
    %v683 = vadd.f32 %v682, %v676
    %v684 = vadd.f32 %v683, %v677
    %v685 = vadd.f32 %v684, %v678
    %v686 = vadd.f32 %v685, %v679
    %v687 = vadd.f32 %v686, %v680
    %v688 = vrot.slane %v687, 4
    %v689 = vadd.f32 %v687, %v688
    %v690 = vrot.slane %v689, 2
    %v691 = vadd.f32 %v689, %v690
    %v692 = vrot.slane %v691, 1
    %v693 = vadd.f32 %v691, %v692
    %694 = vst [vmem:[#allocation2] sm:$0xff] %v693
    // Predicated region
    $region26: #{tpu_custom_call.1} parent=1 // pred_check
      _
    $region27: #{tpu_custom_call.1} parent=1 // pred_check_branch
      %696 = sbr.rel (0) target = $region29
    $region28: #{tpu_custom_call.1} parent=1 // pred_region
      %698 = vsyncadd [#allocation3], 0
      %s700 = sshll.u32 [#allocation2], 4
      %s701 = int_to_ptr.vmem [resolvable:$true] %s700
      %s702 = sshll.u32 %s6, 4
      %s703 = int_to_ptr.hbm [resolvable:$true] %s702
      %705 = dma.vmem_to_hbm [thread:$0]  %s701, 128, %s703, [#allocation3]
    $region29: #{tpu_custom_call.1} parent=1 // pred_fallthru
      _
    // Predicated region
    $region30: #{tpu_custom_call.1} parent=1 // pred_check
      _
    $region31: #{tpu_custom_call.1} parent=1 // pred_check_branch
      %707 = sbr.rel (0) target = $region33
    $region32: #{tpu_custom_call.1} parent=1 // pred_region
      %709 = dma.done [#allocation3], 128
    $region33: #{tpu_custom_call.1} parent=1 // pred_fallthru
      _
    %710 = vsyncpa [#allocation3], 1

</llo_original>
